<compile_context>
chip_gen: v7x
topology: tpu7x:2x2x1
jax: 0.10.0
libtpu: 0.0.40
codegen_flags: <defaults>
</compile_context>

<pallas_src>
import functools

import jax
import jax.numpy as jnp
from jax import lax
from jax.experimental import pallas as pl
from jax.experimental.pallas import tpu as pltpu

LANE = 128
_NEG_FILL = -1e10


def _head_kernel(q_ref, k_ref, v_ref, mask_ref,
                 wq_ref, bq_ref, wk_ref, bk_ref, wv_ref, bv_ref,
                 o_ref,
                 qp_sc, m_sc, l_sc, acc_sc,
                 *, scale):
    ki = pl.program_id(2)
    nk = pl.num_programs(2)

    @pl.when(ki == 0)
    def _init():
        # Project the query tile once per (batch, q-tile); reuse across kv tiles.
        qp = jnp.dot(q_ref[0], wq_ref[...], preferred_element_type=jnp.float32)
        qp = (qp + bq_ref[...]) * scale
        qp_sc[...] = qp.astype(jnp.bfloat16)
        m_sc[...] = jnp.full(m_sc.shape, -jnp.inf, dtype=m_sc.dtype)
        l_sc[...] = jnp.zeros(l_sc.shape, dtype=l_sc.dtype)
        acc_sc[...] = jnp.zeros(acc_sc.shape, dtype=acc_sc.dtype)

    # K / V projections for this kv tile (bf16 MXU operands, f32 accumulation).
    kp = jnp.dot(k_ref[0], wk_ref[...], preferred_element_type=jnp.float32) + bk_ref[...]
    vp = jnp.dot(v_ref[0], wv_ref[...], preferred_element_type=jnp.float32) + bv_ref[...]

    # scores = qp @ kp^T : contract last dims of both operands, no materialized
    # transpose of kp.
    s = lax.dot_general(qp_sc[...], kp.astype(jnp.bfloat16),
                        dimension_numbers=(((1,), (1,)), ((), ())),
                        preferred_element_type=jnp.float32)          # (tq, tk)

    # masked_fill(mask == 0, -1e10); mask is broadcast over the query axis.
    s = jnp.where(mask_ref[0] == 0, jnp.float32(_NEG_FILL), s)

    # Online (flash-style) softmax update, all in f32.
    m_prev = m_sc[...]
    m_new = jnp.maximum(m_prev, jnp.max(s, axis=-1, keepdims=True))
    alpha = jnp.exp(m_prev - m_new)
    p = jnp.exp(s - m_new)
    l_sc[...] = alpha * l_sc[...] + jnp.sum(p, axis=-1, keepdims=True)
    acc_sc[...] = alpha * acc_sc[...] + jnp.dot(
        p.astype(jnp.bfloat16), vp.astype(jnp.bfloat16),
        preferred_element_type=jnp.float32)
    m_sc[...] = m_new

    @pl.when(ki == nk - 1)
    def _finalize():
        inv_l = pl.reciprocal(l_sc[...], approx=True)
        o_ref[0] = (acc_sc[...] * inv_l).astype(o_ref.dtype)


def _pad_last(x, to=LANE):
    """Zero-pad the last dim up to a multiple of `to` (lane-dense)."""
    pad = (-x.shape[-1]) % to
    if pad:
        x = jnp.pad(x, [(0, 0)] * (x.ndim - 1) + [(0, pad)])
    return x


def _pick_tile(S, cap, align):
    """Largest divisor of S that is <= cap and a multiple of `align`; else S."""
    if S <= cap:
        return S
    for t in range(cap, align - 1, -1):
        if S % t == 0 and t % align == 0:
            return t
    return S


def head_forward(q, k, v, params, mask=None, *, q_tile=None, kv_tile=None):
    """q, k, v: (B, S, d_model) float32.  mask: (B, S) or None."""
    B, S, d_model = q.shape
    out_dtype = q.dtype
    wq, bq, wk, bk, wv, bv = params          # wq: (d_model, d_k), bq: (1, d_k) ...
    d_k = wq.shape[1]
    d_v = wv.shape[1]
    scale = 1.0 / (d_k ** 0.5)

    # Pad projection output dims to multiples of 128 (lane-dense MXU N-dims and
    # lane-dense output stores); pads are zeros so results are exact.
    wq_p = _pad_last(wq).astype(jnp.bfloat16)
    wk_p = _pad_last(wk).astype(jnp.bfloat16)
    wv_p = _pad_last(wv).astype(jnp.bfloat16)
    bq_p = _pad_last(bq).astype(jnp.float32)
    bk_p = _pad_last(bk).astype(jnp.float32)
    bv_p = _pad_last(bv).astype(jnp.float32)
    dk_p = wq_p.shape[1]
    dv_p = wv_p.shape[1]

    # bf16 MXU operands for the activation streams (halves HBM traffic).
    qb = q.astype(jnp.bfloat16)
    kb = k.astype(jnp.bfloat16)
    vb = v.astype(jnp.bfloat16)

    if mask is None:
        mask3 = jnp.ones((B, 1, S), dtype=jnp.int32)
    else:
        mask3 = mask.astype(jnp.int32).reshape(B, 1, S)

    # Tile sizes: q tile any multiple of 8, kv tile must be a multiple of 128
    # (or full S) so the mask block / scores stay lane-aligned.
    tq = q_tile or _pick_tile(S, cap=256, align=8)
    tk = kv_tile or _pick_tile(S, cap=256, align=LANE)
    nq = S // tq
    nkv = S // tk

    kernel = functools.partial(_head_kernel, scale=float(scale))

    out = pl.pallas_call(
        kernel,
        out_shape=jax.ShapeDtypeStruct((B, S, dv_p), out_dtype),
        grid_spec=pltpu.PrefetchScalarGridSpec(
            num_scalar_prefetch=0,
            grid=(B, nq, nkv),
            in_specs=[
                pl.BlockSpec((1, tq, d_model), lambda b, qi, ki: (b, qi, 0)),   # q
                pl.BlockSpec((1, tk, d_model), lambda b, qi, ki: (b, ki, 0)),   # k
                pl.BlockSpec((1, tk, d_model), lambda b, qi, ki: (b, ki, 0)),   # v
                pl.BlockSpec((1, 1, tk), lambda b, qi, ki: (b, 0, ki)),         # mask
                pl.BlockSpec((d_model, dk_p), lambda b, qi, ki: (0, 0)),        # wq
                pl.BlockSpec((1, dk_p), lambda b, qi, ki: (0, 0)),              # bq
                pl.BlockSpec((d_model, dk_p), lambda b, qi, ki: (0, 0)),        # wk
                pl.BlockSpec((1, dk_p), lambda b, qi, ki: (0, 0)),              # bk
                pl.BlockSpec((d_model, dv_p), lambda b, qi, ki: (0, 0)),        # wv
                pl.BlockSpec((1, dv_p), lambda b, qi, ki: (0, 0)),              # bv
            ],
            out_specs=pl.BlockSpec((1, tq, dv_p), lambda b, qi, ki: (b, qi, 0)),
            scratch_shapes=[
                pltpu.VMEM((tq, dk_p), jnp.bfloat16),    # projected query tile
                pltpu.VMEM((tq, 1), jnp.float32),        # running max m
                pltpu.VMEM((tq, 1), jnp.float32),        # running sum l
                pltpu.VMEM((tq, dv_p), jnp.float32),     # output accumulator
            ],
        ),
        compiler_params=pltpu.CompilerParams(
            dimension_semantics=("parallel", "parallel", "arbitrary"),
            vmem_limit_bytes=32 * 1024 * 1024,
        ),
    )(qb, kb, vb, mask3, wq_p, bq_p, wk_p, bk_p, wv_p, bv_p)

    return out[..., :d_v]


def init_head_params(key, d_model, d_k, d_v):
    """Deterministic init matching nn.Linear default: U(-1/sqrt(in), 1/sqrt(in)).
    Weights stored pre-transposed as (d_model, d_out); biases as (1, d_out)."""
    ks = jax.random.split(key, 6)
    bound = 1.0 / (d_model ** 0.5)

    def u(k, shape):
        return jax.random.uniform(k, shape, jnp.float32, -bound, bound)

    wq = u(ks[0], (d_model, d_k)); bq = u(ks[1], (1, d_k))
    wk = u(ks[2], (d_model, d_k)); bk = u(ks[3], (1, d_k))
    wv = u(ks[4], (d_model, d_v)); bv = u(ks[5], (1, d_v))
    return (wq, bq, wk, bk, wv, bv)


def head_reference(q, k, v, params, mask=None):
    """Pure-JAX f32 reference mirroring the PyTorch forward."""
    wq, bq, wk, bk, wv, bv = params
    qp = q @ wq + bq
    kp = k @ wk + bk
    vp = v @ wv + bv
    scores = jnp.einsum("bqd,bkd->bqk", qp, kp) / (kp.shape[-1] ** 0.5)
    if mask is not None:
        scores = jnp.where(mask[:, None, :] == 0, _NEG_FILL, scores)
    scores = jax.nn.softmax(scores, axis=-1)
    return jnp.einsum("bqk,bkd->bqd", scores, vp)


if __name__ == "__main__":
    # Small shapes consistent with the module: batch=2, seq=8, d_model=32,
    # d_k=d_v=16 (the PyTorch defaults 512/64/64 also work, just bigger).
    B, S, d_model, d_k, d_v = 2, 8, 32, 16, 16

    key = jax.random.PRNGKey(0)
    kq, kk, kv, km, kp = jax.random.split(key, 5)
    q = jax.random.normal(kq, (B, S, d_model), jnp.float32)
    k = jax.random.normal(kk, (B, S, d_model), jnp.float32)
    v = jax.random.normal(kv, (B, S, d_model), jnp.float32)
    mask = (jax.random.uniform(km, (B, S)) > 0.2).astype(jnp.int32)

    params = init_head_params(kp, d_model, d_k, d_v)

    out = head_forward(q, k, v, params, mask=mask)
    out = jax.block_until_ready(out)

    ref = head_reference(q, k, v, params, mask=mask)
    assert out.shape == (B, S, d_v)
    # bf16 MXU operands (f32 accumulation) -> looser tolerance than pure f32.
    assert jnp.allclose(out, ref, atol=5e-2, rtol=5e-2), "mismatch vs reference"

    # also exercise the mask=None path (matches PyTorch default)
    out_nomask = jax.block_until_ready(head_forward(q, k, v, params, mask=None))
    ref_nomask = head_reference(q, k, v, params, mask=None)
    assert jnp.allclose(out_nomask, ref_nomask, atol=5e-2, rtol=5e-2)

    print("KERNEL_OK")
</pallas_src>

<mosaic_0001>
module attributes {stable_mosaic.version = 11 : i64} {
  func.func @_head_kernel(%arg0: i32, %arg1: i32, %arg2: i32, %arg3: memref<1x8x32xbf16, #tpu.memory_space<vmem>>, %arg4: memref<1x8x32xbf16, #tpu.memory_space<vmem>>, %arg5: memref<1x8x32xbf16, #tpu.memory_space<vmem>>, %arg6: memref<1x1x8xi32, #tpu.memory_space<vmem>>, %arg7: memref<32x128xbf16, #tpu.memory_space<vmem>>, %arg8: memref<1x128xf32, #tpu.memory_space<vmem>>, %arg9: memref<32x128xbf16, #tpu.memory_space<vmem>>, %arg10: memref<1x128xf32, #tpu.memory_space<vmem>>, %arg11: memref<32x128xbf16, #tpu.memory_space<vmem>>, %arg12: memref<1x128xf32, #tpu.memory_space<vmem>>, %arg13: memref<1x8x128xf32, #tpu.memory_space<vmem>>, %arg14: memref<8x128xbf16, #tpu.memory_space<vmem>>, %arg15: memref<8x1xf32, #tpu.memory_space<vmem>>, %arg16: memref<8x1xf32, #tpu.memory_space<vmem>>, %arg17: memref<8x128xf32, #tpu.memory_space<vmem>>) attributes {dimension_semantics = [#tpu.dimension_semantics<parallel>, #tpu.dimension_semantics<parallel>, #tpu.dimension_semantics<arbitrary>], iteration_bounds = array<i64: 2, 1, 1>, scalar_prefetch = 0 : i64, scratch_operands = 4 : i64, tpu.core_type = #tpu.core_type<tc>, window_params = [{transform_indices = @transform_0, window_bounds = array<i64: 1, 8, 32>}, {transform_indices = @transform_1, window_bounds = array<i64: 1, 8, 32>}, {transform_indices = @transform_2, window_bounds = array<i64: 1, 8, 32>}, {transform_indices = @transform_3, window_bounds = array<i64: 1, 1, 8>}, {pipeline_mode = #tpu.pipeline_mode<synchronous>, transform_indices = @transform_4, window_bounds = array<i64: 32, 128>}, {pipeline_mode = #tpu.pipeline_mode<synchronous>, transform_indices = @transform_5, window_bounds = array<i64: 1, 128>}, {pipeline_mode = #tpu.pipeline_mode<synchronous>, transform_indices = @transform_6, window_bounds = array<i64: 32, 128>}, {pipeline_mode = #tpu.pipeline_mode<synchronous>, transform_indices = @transform_7, window_bounds = array<i64: 1, 128>}, {pipeline_mode = #tpu.pipeline_mode<synchronous>, transform_indices = @transform_8, window_bounds = array<i64: 32, 128>}, {pipeline_mode = #tpu.pipeline_mode<synchronous>, transform_indices = @transform_9, window_bounds = array<i64: 1, 128>}, {transform_indices = @transform_10, window_bounds = array<i64: 1, 8, 128>}]} {
    %c0_i32 = arith.constant 0 : i32
    %0 = arith.cmpi eq, %arg2, %c0_i32 : i32
    %1 = arith.extui %0 : i1 to i32
    %c0_i32_0 = arith.constant 0 : i32
    %2 = arith.cmpi ne, %1, %c0_i32_0 : i32
    scf.if %2 {
      %c0_40 = arith.constant 0 : index
      %c0_41 = arith.constant 0 : index
      %c0_42 = arith.constant 0 : index
      %55 = vector.load %arg3[%c0_40, %c0_41, %c0_42] : memref<1x8x32xbf16, #tpu.memory_space<vmem>>, vector<1x8x32xbf16>
      %56 = vector.shape_cast %55 : vector<1x8x32xbf16> to vector<8x32xbf16>
      %c0_43 = arith.constant 0 : index
      %c0_44 = arith.constant 0 : index
      %57 = vector.load %arg7[%c0_43, %c0_44] : memref<32x128xbf16, #tpu.memory_space<vmem>>, vector<32x128xbf16>
      %cst_45 = arith.constant dense<0.000000e+00> : vector<8x128xf32>
      %58 = tpu.matmul %56, %57, %cst_45 {dimension_numbers = #tpu.dot_dimension_numbers<[1], [0], [0], [1], [0, 0, 1, 1], [], []>} : vector<8x32xbf16>, vector<32x128xbf16>, vector<8x128xf32> -> vector<8x128xf32>
      %c0_46 = arith.constant 0 : index
      %c0_47 = arith.constant 0 : index
      %59 = vector.load %arg8[%c0_46, %c0_47] : memref<1x128xf32, #tpu.memory_space<vmem>>, vector<1x128xf32>
      %60 = vector.broadcast %59 : vector<1x128xf32> to vector<8x128xf32>
      %61 = arith.addf %58, %60 : vector<8x128xf32>
      %cst_48 = arith.constant 2.500000e-01 : f32
      %62 = vector.broadcast %cst_48 : f32 to vector<8x128xf32>
      %63 = arith.mulf %61, %62 : vector<8x128xf32>
      %64 = arith.truncf %63 : vector<8x128xf32> to vector<8x128xbf16>
      %c0_49 = arith.constant 0 : index
      %c0_50 = arith.constant 0 : index
      %65 = vector.load %arg14[%c0_49, %c0_50] : memref<8x128xbf16, #tpu.memory_space<vmem>>, vector<8x128xbf16>
      tpu.vector_store %arg14[%c0_49, %c0_50], %64 {strides = array<i32>} : memref<8x128xbf16, #tpu.memory_space<vmem>>, vector<8x128xbf16>,
      %cst_51 = arith.constant 0xFF800000 : f32
      %66 = vector.broadcast %cst_51 : f32 to vector<8x1xf32>
      %c0_52 = arith.constant 0 : index
      %c0_53 = arith.constant 0 : index
      %67 = vector.load %arg15[%c0_52, %c0_53] : memref<8x1xf32, #tpu.memory_space<vmem>>, vector<8x1xf32>
      tpu.vector_store %arg15[%c0_52, %c0_53], %66 {strides = array<i32>} : memref<8x1xf32, #tpu.memory_space<vmem>>, vector<8x1xf32>,
      %cst_54 = arith.constant 0.000000e+00 : f32
      %68 = vector.broadcast %cst_54 : f32 to vector<8x1xf32>
      %c0_55 = arith.constant 0 : index
      %c0_56 = arith.constant 0 : index
      %69 = vector.load %arg16[%c0_55, %c0_56] : memref<8x1xf32, #tpu.memory_space<vmem>>, vector<8x1xf32>
      tpu.vector_store %arg16[%c0_55, %c0_56], %68 {strides = array<i32>} : memref<8x1xf32, #tpu.memory_space<vmem>>, vector<8x1xf32>,
      %cst_57 = arith.constant 0.000000e+00 : f32
      %70 = vector.broadcast %cst_57 : f32 to vector<8x128xf32>
      %c0_58 = arith.constant 0 : index
      %c0_59 = arith.constant 0 : index
      %71 = vector.load %arg17[%c0_58, %c0_59] : memref<8x128xf32, #tpu.memory_space<vmem>>, vector<8x128xf32>
      tpu.vector_store %arg17[%c0_58, %c0_59], %70 {strides = array<i32>} : memref<8x128xf32, #tpu.memory_space<vmem>>, vector<8x128xf32>,
    } else {
    }
    %c0 = arith.constant 0 : index
    %c0_1 = arith.constant 0 : index
    %c0_2 = arith.constant 0 : index
    %3 = vector.load %arg4[%c0, %c0_1, %c0_2] : memref<1x8x32xbf16, #tpu.memory_space<vmem>>, vector<1x8x32xbf16>
    %4 = vector.shape_cast %3 : vector<1x8x32xbf16> to vector<8x32xbf16>
    %c0_3 = arith.constant 0 : index
    %c0_4 = arith.constant 0 : index
    %5 = vector.load %arg9[%c0_3, %c0_4] : memref<32x128xbf16, #tpu.memory_space<vmem>>, vector<32x128xbf16>
    %cst = arith.constant dense<0.000000e+00> : vector<8x128xf32>
    %6 = tpu.matmul %4, %5, %cst {dimension_numbers = #tpu.dot_dimension_numbers<[1], [0], [0], [1], [0, 0, 1, 1], [], []>} : vector<8x32xbf16>, vector<32x128xbf16>, vector<8x128xf32> -> vector<8x128xf32>
    %c0_5 = arith.constant 0 : index
    %c0_6 = arith.constant 0 : index
    %7 = vector.load %arg10[%c0_5, %c0_6] : memref<1x128xf32, #tpu.memory_space<vmem>>, vector<1x128xf32>
    %8 = vector.broadcast %7 : vector<1x128xf32> to vector<8x128xf32>
    %9 = arith.addf %6, %8 : vector<8x128xf32>
    %c0_7 = arith.constant 0 : index
    %c0_8 = arith.constant 0 : index
    %c0_9 = arith.constant 0 : index
    %10 = vector.load %arg5[%c0_7, %c0_8, %c0_9] : memref<1x8x32xbf16, #tpu.memory_space<vmem>>, vector<1x8x32xbf16>
    %11 = vector.shape_cast %10 : vector<1x8x32xbf16> to vector<8x32xbf16>
    %c0_10 = arith.constant 0 : index
    %c0_11 = arith.constant 0 : index
    %12 = vector.load %arg11[%c0_10, %c0_11] : memref<32x128xbf16, #tpu.memory_space<vmem>>, vector<32x128xbf16>
    %cst_12 = arith.constant dense<0.000000e+00> : vector<8x128xf32>
    %13 = tpu.matmul %11, %12, %cst_12 {dimension_numbers = #tpu.dot_dimension_numbers<[1], [0], [0], [1], [0, 0, 1, 1], [], []>} : vector<8x32xbf16>, vector<32x128xbf16>, vector<8x128xf32> -> vector<8x128xf32>
    %c0_13 = arith.constant 0 : index
    %c0_14 = arith.constant 0 : index
    %14 = vector.load %arg12[%c0_13, %c0_14] : memref<1x128xf32, #tpu.memory_space<vmem>>, vector<1x128xf32>
    %15 = vector.broadcast %14 : vector<1x128xf32> to vector<8x128xf32>
    %16 = arith.addf %13, %15 : vector<8x128xf32>
    %c0_15 = arith.constant 0 : index
    %c0_16 = arith.constant 0 : index
    %17 = vector.load %arg14[%c0_15, %c0_16] : memref<8x128xbf16, #tpu.memory_space<vmem>>, vector<8x128xbf16>
    %18 = arith.truncf %9 : vector<8x128xf32> to vector<8x128xbf16>
    %cst_17 = arith.constant dense<0.000000e+00> : vector<8x8xf32>
    %19 = tpu.matmul %17, %18, %cst_17 {dimension_numbers = #tpu.dot_dimension_numbers<[1], [1], [0], [0], [0, 0, 1, 0], [], []>} : vector<8x128xbf16>, vector<8x128xbf16>, vector<8x8xf32> -> vector<8x8xf32>
    %c0_18 = arith.constant 0 : index
    %c0_19 = arith.constant 0 : index
    %c0_20 = arith.constant 0 : index
    %20 = vector.load %arg6[%c0_18, %c0_19, %c0_20] : memref<1x1x8xi32, #tpu.memory_space<vmem>>, vector<1x1x8xi32>
    %21 = vector.shape_cast %20 : vector<1x1x8xi32> to vector<1x8xi32>
    %c0_i32_21 = arith.constant 0 : i32
    %22 = vector.broadcast %c0_i32_21 : i32 to vector<1x8xi32>
    %23 = arith.cmpi eq, %21, %22 : vector<1x8xi32>
    %cst_22 = arith.constant -1.000000e+10 : f32
    %24 = vector.shape_cast %23 : vector<1x8xi1> to vector<1x8xi1>
    %25 = vector.broadcast %24 : vector<1x8xi1> to vector<8x8xi1>
    %26 = vector.broadcast %cst_22 : f32 to vector<8x8xf32>
    %27 = arith.select %25, %26, %19 : vector<8x8xi1>, vector<8x8xf32>
    %c0_23 = arith.constant 0 : index
    %c0_24 = arith.constant 0 : index
    %28 = vector.load %arg15[%c0_23, %c0_24] : memref<8x1xf32, #tpu.memory_space<vmem>>, vector<8x1xf32>
    %cst_25 = arith.constant dense<0xFF800000> : vector<8xf32>
    %29 = vector.multi_reduction <maximumf>, %27, %cst_25 [1] : vector<8x8xf32> to vector<8xf32>
    %30 = vector.shape_cast %29 : vector<8xf32> to vector<8x1xf32>
    %31 = arith.maximumf %28, %30 : vector<8x1xf32>
    %32 = arith.subf %28, %31 : vector<8x1xf32>
    %33 = math.exp %32 : vector<8x1xf32>
    %34 = vector.broadcast %31 : vector<8x1xf32> to vector<8x8xf32>
    %35 = arith.subf %27, %34 : vector<8x8xf32>
    %36 = math.exp %35 : vector<8x8xf32>
    %c0_26 = arith.constant 0 : index
    %c0_27 = arith.constant 0 : index
    %37 = vector.load %arg16[%c0_26, %c0_27] : memref<8x1xf32, #tpu.memory_space<vmem>>, vector<8x1xf32>
    %38 = arith.mulf %33, %37 : vector<8x1xf32>
    %cst_28 = arith.constant dense<0.000000e+00> : vector<8xf32>
    %39 = vector.multi_reduction <add>, %36, %cst_28 [1] : vector<8x8xf32> to vector<8xf32>
    %40 = vector.shape_cast %39 : vector<8xf32> to vector<8x1xf32>
    %41 = arith.addf %38, %40 : vector<8x1xf32>
    %c0_29 = arith.constant 0 : index
    %c0_30 = arith.constant 0 : index
    %42 = vector.load %arg16[%c0_29, %c0_30] : memref<8x1xf32, #tpu.memory_space<vmem>>, vector<8x1xf32>
    tpu.vector_store %arg16[%c0_29, %c0_30], %41 {strides = array<i32>} : memref<8x1xf32, #tpu.memory_space<vmem>>, vector<8x1xf32>,
    %c0_31 = arith.constant 0 : index
    %c0_32 = arith.constant 0 : index
    %43 = vector.load %arg17[%c0_31, %c0_32] : memref<8x128xf32, #tpu.memory_space<vmem>>, vector<8x128xf32>
    %44 = vector.broadcast %33 : vector<8x1xf32> to vector<8x128xf32>
    %45 = arith.mulf %44, %43 : vector<8x128xf32>
    %46 = arith.truncf %36 : vector<8x8xf32> to vector<8x8xbf16>
    %47 = arith.truncf %16 : vector<8x128xf32> to vector<8x128xbf16>
    %cst_33 = arith.constant dense<0.000000e+00> : vector<8x128xf32>
    %48 = tpu.matmul %46, %47, %cst_33 {dimension_numbers = #tpu.dot_dimension_numbers<[1], [0], [0], [1], [0, 0, 1, 1], [], []>} : vector<8x8xbf16>, vector<8x128xbf16>, vector<8x128xf32> -> vector<8x128xf32>
    %49 = arith.addf %45, %48 : vector<8x128xf32>
    %c0_34 = arith.constant 0 : index
    %c0_35 = arith.constant 0 : index
    %50 = vector.load %arg17[%c0_34, %c0_35] : memref<8x128xf32, #tpu.memory_space<vmem>>, vector<8x128xf32>
    tpu.vector_store %arg17[%c0_34, %c0_35], %49 {strides = array<i32>} : memref<8x128xf32, #tpu.memory_space<vmem>>, vector<8x128xf32>,
    %c0_36 = arith.constant 0 : index
    %c0_37 = arith.constant 0 : index
    %51 = vector.load %arg15[%c0_36, %c0_37] : memref<8x1xf32, #tpu.memory_space<vmem>>, vector<8x1xf32>
    tpu.vector_store %arg15[%c0_36, %c0_37], %31 {strides = array<i32>} : memref<8x1xf32, #tpu.memory_space<vmem>>, vector<8x1xf32>,
    %c0_i32_38 = arith.constant 0 : i32
    %52 = arith.cmpi eq, %arg2, %c0_i32_38 : i32
    %53 = arith.extui %52 : i1 to i32
    %c0_i32_39 = arith.constant 0 : i32
    %54 = arith.cmpi ne, %53, %c0_i32_39 : i32
    scf.if %54 {
      %c0_40 = arith.constant 0 : index
      %c0_41 = arith.constant 0 : index
      %55 = vector.load %arg16[%c0_40, %c0_41] : memref<8x1xf32, #tpu.memory_space<vmem>>, vector<8x1xf32>
      %56 = tpu.reciprocal %55 {approx = true} : vector<8x1xf32> -> vector<8x1xf32>
      %c0_42 = arith.constant 0 : index
      %c0_43 = arith.constant 0 : index
      %57 = vector.load %arg17[%c0_42, %c0_43] : memref<8x128xf32, #tpu.memory_space<vmem>>, vector<8x128xf32>
      %58 = vector.broadcast %56 : vector<8x1xf32> to vector<8x128xf32>
      %59 = arith.mulf %57, %58 : vector<8x128xf32>
      %c0_44 = arith.constant 0 : index
      %c0_45 = arith.constant 0 : index
      %c0_46 = arith.constant 0 : index
      %60 = vector.load %arg13[%c0_44, %c0_45, %c0_46] : memref<1x8x128xf32, #tpu.memory_space<vmem>>, vector<1x8x128xf32>
      %61 = vector.shape_cast %60 : vector<1x8x128xf32> to vector<8x128xf32>
      %62 = vector.shape_cast %59 : vector<8x128xf32> to vector<1x8x128xf32>
      tpu.vector_store %arg13[%c0_44, %c0_45, %c0_46], %62 {strides = array<i32>} : memref<1x8x128xf32, #tpu.memory_space<vmem>>, vector<1x8x128xf32>,
    } else {
    }
    return
  }
  func.func @transform_0(%arg0: i32, %arg1: i32, %arg2: i32) -> (i32, i32, i32) {
    %c0_i32 = arith.constant 0 : i32
    %c0_i32_0 = arith.constant 0 : i32
    return %arg0, %arg1, %c0_i32 : i32, i32, i32
  }
  func.func @transform_1(%arg0: i32, %arg1: i32, %arg2: i32) -> (i32, i32, i32) {
    %c0_i32 = arith.constant 0 : i32
    %c0_i32_0 = arith.constant 0 : i32
    return %arg0, %arg2, %c0_i32 : i32, i32, i32
  }
  func.func @transform_2(%arg0: i32, %arg1: i32, %arg2: i32) -> (i32, i32, i32) {
    %c0_i32 = arith.constant 0 : i32
    %c0_i32_0 = arith.constant 0 : i32
    return %arg0, %arg2, %c0_i32 : i32, i32, i32
  }
  func.func @transform_3(%arg0: i32, %arg1: i32, %arg2: i32) -> (i32, i32, i32) {
    %c0_i32 = arith.constant 0 : i32
    %c0_i32_0 = arith.constant 0 : i32
    return %arg0, %c0_i32, %arg2 : i32, i32, i32
  }
  func.func @transform_4(%arg0: i32, %arg1: i32, %arg2: i32) -> (i32, i32) {
    %c0_i32 = arith.constant 0 : i32
    %c0_i32_0 = arith.constant 0 : i32
    %c0_i32_1 = arith.constant 0 : i32
    return %c0_i32, %c0_i32_0 : i32, i32
  }
  func.func @transform_5(%arg0: i32, %arg1: i32, %arg2: i32) -> (i32, i32) {
    %c0_i32 = arith.constant 0 : i32
    %c0_i32_0 = arith.constant 0 : i32
    %c0_i32_1 = arith.constant 0 : i32
    return %c0_i32, %c0_i32_0 : i32, i32
  }
  func.func @transform_6(%arg0: i32, %arg1: i32, %arg2: i32) -> (i32, i32) {
    %c0_i32 = arith.constant 0 : i32
    %c0_i32_0 = arith.constant 0 : i32
    %c0_i32_1 = arith.constant 0 : i32
    return %c0_i32, %c0_i32_0 : i32, i32
  }
  func.func @transform_7(%arg0: i32, %arg1: i32, %arg2: i32) -> (i32, i32) {
    %c0_i32 = arith.constant 0 : i32
    %c0_i32_0 = arith.constant 0 : i32
    %c0_i32_1 = arith.constant 0 : i32
    return %c0_i32, %c0_i32_0 : i32, i32
  }
  func.func @transform_8(%arg0: i32, %arg1: i32, %arg2: i32) -> (i32, i32) {
    %c0_i32 = arith.constant 0 : i32
    %c0_i32_0 = arith.constant 0 : i32
    %c0_i32_1 = arith.constant 0 : i32
    return %c0_i32, %c0_i32_0 : i32, i32
  }
  func.func @transform_9(%arg0: i32, %arg1: i32, %arg2: i32) -> (i32, i32) {
    %c0_i32 = arith.constant 0 : i32
    %c0_i32_0 = arith.constant 0 : i32
    %c0_i32_1 = arith.constant 0 : i32
    return %c0_i32, %c0_i32_0 : i32, i32
  }
  func.func @transform_10(%arg0: i32, %arg1: i32, %arg2: i32) -> (i32, i32, i32) {
    %c0_i32 = arith.constant 0 : i32
    %c0_i32_0 = arith.constant 0 : i32
    return %arg0, %arg1, %c0_i32 : i32, i32, i32
  }
}

</mosaic_0001>

<llo_original>
// kernel: tpu_custom_call.1
$region0: #{tpu_custom_call.1}
  #allocation0 [shape = 'u32[]', space=smem, size = 0x4, offset = 0x4, fixed_abs, tag = 'smem constant byte address 0x4 - core index']
  #allocation1 [shape = 'u32[144,128]{1,0:T(1,128)}', space=vmem, size = 0x12000, scoped, tag = 'internal scratch']
  #allocation2 [shape = 'bf16[8,128]{1,0:T(8,128)(2,1)}', space=vmem, size = 0x800, scoped, tag = 'scratch operand']
  #allocation3 [shape = 'f32[8,1]{1,0:T(8,128)}', space=vmem, size = 0x1000, scoped, tag = 'scratch operand']
  #allocation4 [shape = 'f32[8,1]{1,0:T(8,128)}', space=vmem, size = 0x1000, scoped, tag = 'scratch operand']
  #allocation5 [shape = 'f32[8,128]{1,0:T(8,128)}', space=vmem, size = 0x1000, scoped, tag = 'scratch operand']
  %s0 = inlined_call_operand.hbm [shape: bf16[2,8,32], index: 0, kind: input, shape index: {}]
  %s1 = inlined_call_operand.hbm [shape: bf16[2,8,32], index: 1, kind: input, shape index: {}]
  %s2 = inlined_call_operand.hbm [shape: bf16[2,8,32], index: 2, kind: input, shape index: {}]
  %s3 = inlined_call_operand.vmem [shape: s32[2,1,8], index: 3, kind: input, shape index: {}]
  %s4 = inlined_call_operand.hbm [shape: bf16[32,128], index: 4, kind: input, shape index: {}]
  %s5 = inlined_call_operand.vmem [shape: f32[1,128], index: 5, kind: input, shape index: {}]
  %s6 = inlined_call_operand.vmem [shape: bf16[32,128], index: 6, kind: input, shape index: {}]
  %s7 = inlined_call_operand.vmem [shape: f32[1,128], index: 7, kind: input, shape index: {}]
  %s8 = inlined_call_operand.hbm [shape: bf16[32,128], index: 8, kind: input, shape index: {}]
  %s9 = inlined_call_operand.vmem [shape: f32[1,128], index: 9, kind: input, shape index: {}]
  %s10 = inlined_call_operand.hbm [shape: f32[2,8,128], index: 10, kind: output, shape index: {}]
  %s11 = sld [smem:[#allocation0]]
  $region101: #{tpu_custom_call.1} parent=0
    _
  %s13 = ssub.s32 1, %s11
  %s14 = scalar_select 0, %s13, %s11
  $region1: #{tpu_custom_call.1} parent=0
    #allocation6 [shape = 'u8[4096]{0}', space=vmem, size = 0x1000, scoped, tag = 'input window, operand 0']
    #allocation7 [shape = 's32[2]{0}', space=sflag, size = 0x8, scoped, tag = 'scoped memory for tpu_custom_call.1']
    #allocation8 [shape = 's32[2]{0}', space=sflag, size = 0x8, scoped, tag = 'scoped memory for tpu_custom_call.1']
    #allocation9 [shape = 'u8[4096]{0}', space=vmem, size = 0x1000, scoped, tag = 'input window, operand 1']
    #allocation10 [shape = 's32[2]{0}', space=sflag, size = 0x8, scoped, tag = 'scoped memory for tpu_custom_call.1']
    #allocation11 [shape = 'u8[4096]{0}', space=vmem, size = 0x1000, scoped, tag = 'input window, operand 2']
    #allocation12 [shape = 'u8[8192]{0}', space=vmem, size = 0x2000, scoped, tag = 'input window, operand 4, single buffered']
    #allocation13 [shape = 's32[1]{0}', space=sflag, size = 0x4, scoped, tag = 'scoped memory for tpu_custom_call.1']
    #allocation14 [shape = 'u8[8192]{0}', space=vmem, size = 0x2000, scoped, tag = 'input window, operand 8, single buffered']
    #allocation15 [shape = 'u8[8192]{0}', space=vmem, size = 0x2000, scoped, tag = 'output window, operand 0']
    %15 = vsyncpa [#allocation7], 0
    %s16 = scalar_lea.sflag [#allocation7], 1
    %17 = vsyncpa %s16, 0
    %18 = vsyncpa [#allocation10], 0
    %s19 = scalar_lea.sflag [#allocation10], 1
    %20 = vsyncpa %s19, 0
    %21 = vsyncpa [#allocation13], 0
    %22 = vsyncpa [#allocation8], 0
    %s23 = scalar_lea.sflag [#allocation8], 1
    %24 = vsyncpa %s23, 0
    loop: start=0, step=1, limit=4
    $region2: #{tpu_custom_call.1} parent=1 // loop_pre_header
      _
    $region3: #{tpu_custom_call.1} parent=1 // loop_header
      %s26 = sphi 0, %s30
      %p27 = scmp.ge.s32.totalorder %s26, 4
      %s33 = sphi 0, %s52
      %s34 = sphi 0, %s48
      %s35 = sphi 0, %s44
      %s36 = sphi 0, %s33
      %s37 = sphi 0, %s34
      %s38 = sphi 0, %s35
      %s39 = sphi 0, %s36
      %s40 = sphi 0, %s37
      %s41 = sphi 0, %s38
      %s57 = sphi 0, %s59
      %s60 = sphi 0, %s57
      %s61 = sphi 0, %s60
      %s77 = sphi 0, %s61
      %s85 = sphi 0, %s87
      %s88 = sphi 0, %s85
      %s89 = sphi 0, %s88
      %s105 = sphi 0, %s89
      %s113 = sphi 0, %s115
      %s116 = sphi 0, %s113
      %s117 = sphi 0, %s116
      %s133 = sphi 0, %s117
      %s141 = sphi 0, %s143
      %s144 = sphi 0, %s141
      %s145 = sphi 0, %s144
      %s161 = sphi 0, %s145
      %s165 = sphi 0, %s165
      %s167 = sphi 0, %s165
      %s168 = sphi 0, %s167
      %s182 = sphi 0, %s168
      %s186 = sphi 0, %s186
      %s188 = sphi 0, %s186
      %s189 = sphi 0, %s188
      %s203 = sphi 0, %s189
      %s207 = sphi 0, %s207
      %s209 = sphi 0, %s207
      %s210 = sphi 0, %s209
      %s224 = sphi 0, %s210
      %s228 = sphi 0, %s228
      %s230 = sphi 0, %s228
      %s231 = sphi 0, %s230
      %s245 = sphi 0, %s231
      %s249 = sphi 0, %s249
      %s251 = sphi 0, %s249
      %s252 = sphi 0, %s251
      %s266 = sphi 0, %s252
      %s270 = sphi 0, %s270
      %s272 = sphi 0, %s270
      %s273 = sphi 0, %s272
      %s287 = sphi 0, %s273
      %s295 = sphi 0, %s297
      %s298 = sphi 0, %s295
      %s299 = sphi 0, %s298
      %s315 = sphi 0, %s299
    $region4: #{tpu_custom_call.1} parent=1 // loop_header_branch
      %29 = sbr.rel (%p27) target = $region8
    $region5: #{tpu_custom_call.1} parent=1 // loop_body
      %s31 = ssub.s32 %s26, 1
      %s32 = ssub.s32 %s26, 2
      %s42 = sadd.s32 1, %s35
      %p43 = scmp.ge.s32.totalorder %s42, 1
      %s44 = scalar_select %p43, 0, %s42
      %s45 = sadd.s32 1, %s34
      %s46 = scalar_select %p43, %s45, %s34
      %p47 = scmp.ge.s32.totalorder %s46, 1
      %s48 = scalar_select %p47, 0, %s46
      %s49 = sadd.s32 1, %s33
      %s50 = scalar_select %p47, %s49, %s33
      %p51 = scmp.ge.s32.totalorder %s50, 2
      %s52 = scalar_select %p51, 0, %s50
      %s53 = ssub.s32 %s33, %s52
      %s54 = ssub.s32 %s34, %s48
      %s55 = sor.u32 %s53, %s54
      %p56 = scmp.eq.s32.totalorder %s55, 0
      %s58 = sadd.s32 %s57, 1
      %s59 = scalar_select %p56, %s57, %s58
      %p62 = pneg %p56
      %p63 = scmp.eq.s32.totalorder %s26, 1
      %p64 = por %p62, %p63
      %p65 = scmp.ne.s32.totalorder %s57, %s60
      %p66 = scmp.eq.s32.totalorder %s26, 0
      %p67 = por %p65, %p66
      %p68 = scmp.ne.s32.totalorder %s57, %s60
      %p69 = scmp.eq.s32.totalorder %s31, 1
      %p70 = por %p68, %p69
      %p71 = scmp.ne.s32.totalorder %s60, %s61
      %p72 = scmp.eq.s32.totalorder %s31, 0
      %p73 = por %p71, %p72
      %p74 = scmp.ne.s32.totalorder %s60, %s61
      %p75 = scmp.eq.s32.totalorder %s32, 1
      %p76 = por %p74, %p75
      %p78 = scmp.ne.s32.totalorder %s61, %s77
      %p79 = scmp.eq.s32.totalorder %s32, 0
      %p80 = por %p78, %p79
      %s81 = ssub.s32 %s33, %s52
      %s82 = ssub.s32 %s35, %s44
      %s83 = sor.u32 %s81, %s82
      %p84 = scmp.eq.s32.totalorder %s83, 0
      %s86 = sadd.s32 %s85, 1
      %s87 = scalar_select %p84, %s85, %s86
      %p90 = pneg %p84
      %p91 = scmp.eq.s32.totalorder %s26, 1
      %p92 = por %p90, %p91
      %p93 = scmp.ne.s32.totalorder %s85, %s88
      %p94 = scmp.eq.s32.totalorder %s26, 0
      %p95 = por %p93, %p94
      %p96 = scmp.ne.s32.totalorder %s85, %s88
      %p97 = scmp.eq.s32.totalorder %s31, 1
      %p98 = por %p96, %p97
      %p99 = scmp.ne.s32.totalorder %s88, %s89
      %p100 = scmp.eq.s32.totalorder %s31, 0
      %p101 = por %p99, %p100
      %p102 = scmp.ne.s32.totalorder %s88, %s89
      %p103 = scmp.eq.s32.totalorder %s32, 1
      %p104 = por %p102, %p103
      %p106 = scmp.ne.s32.totalorder %s89, %s105
      %p107 = scmp.eq.s32.totalorder %s32, 0
      %p108 = por %p106, %p107
      %s109 = ssub.s32 %s33, %s52
      %s110 = ssub.s32 %s35, %s44
      %s111 = sor.u32 %s109, %s110
      %p112 = scmp.eq.s32.totalorder %s111, 0
      %s114 = sadd.s32 %s113, 1
      %s115 = scalar_select %p112, %s113, %s114
      %p118 = pneg %p112
      %p119 = scmp.eq.s32.totalorder %s26, 1
      %p120 = por %p118, %p119
      %p121 = scmp.ne.s32.totalorder %s113, %s116
      %p122 = scmp.eq.s32.totalorder %s26, 0
      %p123 = por %p121, %p122
      %p124 = scmp.ne.s32.totalorder %s113, %s116
      %p125 = scmp.eq.s32.totalorder %s31, 1
      %p126 = por %p124, %p125
      %p127 = scmp.ne.s32.totalorder %s116, %s117
      %p128 = scmp.eq.s32.totalorder %s31, 0
      %p129 = por %p127, %p128
      %p130 = scmp.ne.s32.totalorder %s116, %s117
      %p131 = scmp.eq.s32.totalorder %s32, 1
      %p132 = por %p130, %p131
      %p134 = scmp.ne.s32.totalorder %s117, %s133
      %p135 = scmp.eq.s32.totalorder %s32, 0
      %p136 = por %p134, %p135
      %s137 = ssub.s32 %s33, %s52
      %s138 = ssub.s32 %s35, %s44
      %s139 = sor.u32 %s137, %s138
      %p140 = scmp.eq.s32.totalorder %s139, 0
      %s142 = sadd.s32 %s141, 1
      %s143 = scalar_select %p140, %s141, %s142
      %p146 = pneg %p140
      %p147 = scmp.eq.s32.totalorder %s26, 1
      %p148 = por %p146, %p147
      %p149 = scmp.ne.s32.totalorder %s141, %s144
      %p150 = scmp.eq.s32.totalorder %s26, 0
      %p151 = por %p149, %p150
      %p152 = scmp.ne.s32.totalorder %s141, %s144
      %p153 = scmp.eq.s32.totalorder %s31, 1
      %p154 = por %p152, %p153
      %p155 = scmp.ne.s32.totalorder %s144, %s145
      %p156 = scmp.eq.s32.totalorder %s31, 0
      %p157 = por %p155, %p156
      %p158 = scmp.ne.s32.totalorder %s144, %s145
      %p159 = scmp.eq.s32.totalorder %s32, 1
      %p160 = por %p158, %p159
      %p162 = scmp.ne.s32.totalorder %s145, %s161
      %p163 = scmp.eq.s32.totalorder %s32, 0
      %p164 = por %p162, %p163
      %s166 = sadd.s32 %s165, 1
      %p169 = scmp.eq.s32.totalorder %s26, 1
      %p170 = scmp.ne.s32.totalorder %s165, %s167
      %p171 = scmp.eq.s32.totalorder %s26, 0
      %p172 = por %p170, %p171
      %p173 = scmp.ne.s32.totalorder %s165, %s167
      %p174 = scmp.eq.s32.totalorder %s31, 1
      %p175 = por %p173, %p174
      %p176 = scmp.ne.s32.totalorder %s167, %s168
      %p177 = scmp.eq.s32.totalorder %s31, 0
      %p178 = por %p176, %p177
      %p179 = scmp.ne.s32.totalorder %s167, %s168
      %p180 = scmp.eq.s32.totalorder %s32, 1
      %p181 = por %p179, %p180
      %p183 = scmp.ne.s32.totalorder %s168, %s182
      %p184 = scmp.eq.s32.totalorder %s32, 0
      %p185 = por %p183, %p184
      %s187 = sadd.s32 %s186, 1
      %p190 = scmp.eq.s32.totalorder %s26, 1
      %p191 = scmp.ne.s32.totalorder %s186, %s188
      %p192 = scmp.eq.s32.totalorder %s26, 0
      %p193 = por %p191, %p192
      %p194 = scmp.ne.s32.totalorder %s186, %s188
      %p195 = scmp.eq.s32.totalorder %s31, 1
      %p196 = por %p194, %p195
      %p197 = scmp.ne.s32.totalorder %s188, %s189
      %p198 = scmp.eq.s32.totalorder %s31, 0
      %p199 = por %p197, %p198
      %p200 = scmp.ne.s32.totalorder %s188, %s189
      %p201 = scmp.eq.s32.totalorder %s32, 1
      %p202 = por %p200, %p201
      %p204 = scmp.ne.s32.totalorder %s189, %s203
      %p205 = scmp.eq.s32.totalorder %s32, 0
      %p206 = por %p204, %p205
      %s208 = sadd.s32 %s207, 1
      %p211 = scmp.eq.s32.totalorder %s26, 1
      %p212 = scmp.ne.s32.totalorder %s207, %s209
      %p213 = scmp.eq.s32.totalorder %s26, 0
      %p214 = por %p212, %p213
      %p215 = scmp.ne.s32.totalorder %s207, %s209
      %p216 = scmp.eq.s32.totalorder %s31, 1
      %p217 = por %p215, %p216
      %p218 = scmp.ne.s32.totalorder %s209, %s210
      %p219 = scmp.eq.s32.totalorder %s31, 0
      %p220 = por %p218, %p219
      %p221 = scmp.ne.s32.totalorder %s209, %s210
      %p222 = scmp.eq.s32.totalorder %s32, 1
      %p223 = por %p221, %p222
      %p225 = scmp.ne.s32.totalorder %s210, %s224
      %p226 = scmp.eq.s32.totalorder %s32, 0
      %p227 = por %p225, %p226
      %s229 = sadd.s32 %s228, 1
      %p232 = scmp.eq.s32.totalorder %s26, 1
      %p233 = scmp.ne.s32.totalorder %s228, %s230
      %p234 = scmp.eq.s32.totalorder %s26, 0
      %p235 = por %p233, %p234
      %p236 = scmp.ne.s32.totalorder %s228, %s230
      %p237 = scmp.eq.s32.totalorder %s31, 1
      %p238 = por %p236, %p237
      %p239 = scmp.ne.s32.totalorder %s230, %s231
      %p240 = scmp.eq.s32.totalorder %s31, 0
      %p241 = por %p239, %p240
      %p242 = scmp.ne.s32.totalorder %s230, %s231
      %p243 = scmp.eq.s32.totalorder %s32, 1
      %p244 = por %p242, %p243
      %p246 = scmp.ne.s32.totalorder %s231, %s245
      %p247 = scmp.eq.s32.totalorder %s32, 0
      %p248 = por %p246, %p247
      %s250 = sadd.s32 %s249, 1
      %p253 = scmp.eq.s32.totalorder %s26, 1
      %p254 = scmp.ne.s32.totalorder %s249, %s251
      %p255 = scmp.eq.s32.totalorder %s26, 0
      %p256 = por %p254, %p255
      %p257 = scmp.ne.s32.totalorder %s249, %s251
      %p258 = scmp.eq.s32.totalorder %s31, 1
      %p259 = por %p257, %p258
      %p260 = scmp.ne.s32.totalorder %s251, %s252
      %p261 = scmp.eq.s32.totalorder %s31, 0
      %p262 = por %p260, %p261
      %p263 = scmp.ne.s32.totalorder %s251, %s252
      %p264 = scmp.eq.s32.totalorder %s32, 1
      %p265 = por %p263, %p264
      %p267 = scmp.ne.s32.totalorder %s252, %s266
      %p268 = scmp.eq.s32.totalorder %s32, 0
      %p269 = por %p267, %p268
      %s271 = sadd.s32 %s270, 1
      %p274 = scmp.eq.s32.totalorder %s26, 1
      %p275 = scmp.ne.s32.totalorder %s270, %s272
      %p276 = scmp.eq.s32.totalorder %s26, 0
      %p277 = por %p275, %p276
      %p278 = scmp.ne.s32.totalorder %s270, %s272
      %p279 = scmp.eq.s32.totalorder %s31, 1
      %p280 = por %p278, %p279
      %p281 = scmp.ne.s32.totalorder %s272, %s273
      %p282 = scmp.eq.s32.totalorder %s31, 0
      %p283 = por %p281, %p282
      %p284 = scmp.ne.s32.totalorder %s272, %s273
      %p285 = scmp.eq.s32.totalorder %s32, 1
      %p286 = por %p284, %p285
      %p288 = scmp.ne.s32.totalorder %s273, %s287
      %p289 = scmp.eq.s32.totalorder %s32, 0
      %p290 = por %p288, %p289
      %s291 = ssub.s32 %s33, %s52
      %s292 = ssub.s32 %s34, %s48
      %s293 = sor.u32 %s291, %s292
      %p294 = scmp.eq.s32.totalorder %s293, 0
      %s296 = sadd.s32 %s295, 1
      %s297 = scalar_select %p294, %s295, %s296
      %p300 = pneg %p294
      %p301 = scmp.eq.s32.totalorder %s26, 1
      %p302 = por %p300, %p301
      %p303 = scmp.ne.s32.totalorder %s295, %s298
      %p304 = scmp.eq.s32.totalorder %s26, 0
      %p305 = por %p303, %p304
      %p306 = scmp.ne.s32.totalorder %s295, %s298
      %p307 = scmp.eq.s32.totalorder %s31, 1
      %p308 = por %p306, %p307
      %p309 = scmp.ne.s32.totalorder %s298, %s299
      %p310 = scmp.eq.s32.totalorder %s31, 0
      %p311 = por %p309, %p310
      %p312 = scmp.ne.s32.totalorder %s298, %s299
      %p313 = scmp.eq.s32.totalorder %s32, 1
      %p314 = por %p312, %p313
      %p316 = scmp.ne.s32.totalorder %s299, %s315
      %p317 = scmp.eq.s32.totalorder %s32, 0
      %p318 = por %p316, %p317
      %p319 = scmp.le.s32.totalorder 1, %s26
      %p320 = scmp.lt.s32.totalorder %s26, 3
      %p321 = pnand %p319, %p320
      %p322 = pneg %p321
      // Predicated region
      $region9: #{tpu_custom_call.1} parent=5 // pred_check
        _
      $region10: #{tpu_custom_call.1} parent=5 // pred_check_branch
        %324 = sbr.rel (%p321) target = $region12
      $region11: #{tpu_custom_call.1} parent=5 // pred_region
        %s325 = ssub.s32 %s26, 1
        // Predicated region
        $region13: #{tpu_custom_call.1} parent=11 // pred_check
          %p326 = pneg %p178
        $region14: #{tpu_custom_call.1} parent=11 // pred_check_branch
          %328 = sbr.rel (%p326) target = $region16
        $region15: #{tpu_custom_call.1} parent=11 // pred_region
          %s330 = ssub.s32 256, 256
          %331 = vsyncadd [#allocation13], %s330
          %s332 = sshll.u32 [#allocation12], 4
          %s333 = int_to_ptr.vmem [resolvable:$true] %s332
          %338 = dma.hbm_to_vmem [thread:$0]  %s4, 256, %s333, [#allocation13], 64, 64, 4
        $region16: #{tpu_custom_call.1} parent=11 // pred_fallthru
          _
        // Predicated region
        $region17: #{tpu_custom_call.1} parent=11 // pred_check
          %p339 = pneg %p199
        $region18: #{tpu_custom_call.1} parent=11 // pred_check_branch
          %341 = sbr.rel (%p339) target = $region20
        $region19: #{tpu_custom_call.1} parent=11 // pred_region
          _
        $region20: #{tpu_custom_call.1} parent=11 // pred_fallthru
          _
        // Predicated region
        $region21: #{tpu_custom_call.1} parent=11 // pred_check
          %p342 = pneg %p220
        $region22: #{tpu_custom_call.1} parent=11 // pred_check_branch
          %344 = sbr.rel (%p342) target = $region24
        $region23: #{tpu_custom_call.1} parent=11 // pred_region
          _
        $region24: #{tpu_custom_call.1} parent=11 // pred_fallthru
          _
        // Predicated region
        $region25: #{tpu_custom_call.1} parent=11 // pred_check
          %p345 = pneg %p241
        $region26: #{tpu_custom_call.1} parent=11 // pred_check_branch
          %347 = sbr.rel (%p345) target = $region28
        $region27: #{tpu_custom_call.1} parent=11 // pred_region
          _
        $region28: #{tpu_custom_call.1} parent=11 // pred_fallthru
          _
        // Predicated region
        $region29: #{tpu_custom_call.1} parent=11 // pred_check
          %p348 = pneg %p262
        $region30: #{tpu_custom_call.1} parent=11 // pred_check_branch
          %350 = sbr.rel (%p348) target = $region32
        $region31: #{tpu_custom_call.1} parent=11 // pred_region
          %s352 = ssub.s32 256, 256
          %353 = vsyncadd [#allocation13], %s352
          %s354 = sshll.u32 [#allocation14], 4
          %s355 = int_to_ptr.vmem [resolvable:$true] %s354
          %360 = dma.hbm_to_vmem [thread:$0]  %s8, 256, %s355, [#allocation13], 64, 64, 4
        $region32: #{tpu_custom_call.1} parent=11 // pred_fallthru
          _
        // Predicated region
        $region33: #{tpu_custom_call.1} parent=11 // pred_check
          %p361 = pneg %p283
        $region34: #{tpu_custom_call.1} parent=11 // pred_check_branch
          %363 = sbr.rel (%p361) target = $region36
        $region35: #{tpu_custom_call.1} parent=11 // pred_region
          _
        $region36: #{tpu_custom_call.1} parent=11 // pred_fallthru
          _
      $region12: #{tpu_custom_call.1} parent=5 // pred_fallthru
        _
      %p364 = scmp.lt.s32.totalorder %s26, 2
      // Predicated region
      $region37: #{tpu_custom_call.1} parent=5 // pred_check
        %p365 = pneg %p364
      $region38: #{tpu_custom_call.1} parent=5 // pred_check_branch
        %367 = sbr.rel (%p365) target = $region40
      $region39: #{tpu_custom_call.1} parent=5 // pred_region
        // Predicated region
        $region41: #{tpu_custom_call.1} parent=39 // pred_check
          %p368 = pneg %p67
        $region42: #{tpu_custom_call.1} parent=39 // pred_check_branch
          %370 = sbr.rel (%p368) target = $region44
        $region43: #{tpu_custom_call.1} parent=39 // pred_region
          %s371 = sand.u32 %s57, 1
          %s372 = scalar_lea.sflag [#allocation7], %s371
          %s373 = sand.u32 %s57, 1
          %s374 = smul.addr %s373, 4
          %s375 = scalar_lea.vmem [#allocation6], %s374
          %s377 = ssub.s32 64, 64
          %378 = vsyncadd %s372, %s377
          %s379 = sadd.s32 %s34, %s33
          %s380 = smul.addr %s379, 64
          %s381 = scalar_lea.hbm %s0, %s380
          %s383 = sshll.u32 %s375, 4
          %s384 = int_to_ptr.vmem [resolvable:$true] %s383
          %386 = dma.hbm_to_vmem [thread:$0]  %s381, 64, %s384, %s372
        $region44: #{tpu_custom_call.1} parent=39 // pred_fallthru
          _
        // Predicated region
        $region45: #{tpu_custom_call.1} parent=39 // pred_check
          %p387 = pneg %p95
        $region46: #{tpu_custom_call.1} parent=39 // pred_check_branch
          %389 = sbr.rel (%p387) target = $region48
        $region47: #{tpu_custom_call.1} parent=39 // pred_region
          %s390 = sand.u32 %s26, 1
          %s391 = scalar_lea.sflag [#allocation10], %s390
          %s392 = sand.u32 %s85, 1
          %s393 = smul.addr %s392, 4
          %s394 = scalar_lea.vmem [#allocation9], %s393
          %s396 = ssub.s32 64, 64
          %397 = vsyncadd %s391, %s396
          %s398 = sadd.s32 %s35, %s33
          %s399 = smul.addr %s398, 64
          %s400 = scalar_lea.hbm %s1, %s399
          %s402 = sshll.u32 %s394, 4
          %s403 = int_to_ptr.vmem [resolvable:$true] %s402
          %405 = dma.hbm_to_vmem [thread:$0]  %s400, 64, %s403, %s391
        $region48: #{tpu_custom_call.1} parent=39 // pred_fallthru
          _
        // Predicated region
        $region49: #{tpu_custom_call.1} parent=39 // pred_check
          %p406 = pneg %p123
        $region50: #{tpu_custom_call.1} parent=39 // pred_check_branch
          %408 = sbr.rel (%p406) target = $region52
        $region51: #{tpu_custom_call.1} parent=39 // pred_region
          %s409 = sand.u32 %s26, 1
          %s410 = scalar_lea.sflag [#allocation10], %s409
          %s411 = sand.u32 %s113, 1
          %s412 = smul.addr %s411, 4
          %s413 = scalar_lea.vmem [#allocation11], %s412
          %s415 = ssub.s32 64, 64
          %416 = vsyncadd %s410, %s415
          %s417 = sadd.s32 %s35, %s33
          %s418 = smul.addr %s417, 64
          %s419 = scalar_lea.hbm %s2, %s418
          %s421 = sshll.u32 %s413, 4
          %s422 = int_to_ptr.vmem [resolvable:$true] %s421
          %424 = dma.hbm_to_vmem [thread:$0]  %s419, 64, %s422, %s410
        $region52: #{tpu_custom_call.1} parent=39 // pred_fallthru
          _
        // Predicated region
        $region53: #{tpu_custom_call.1} parent=39 // pred_check
          %p425 = pneg %p151
        $region54: #{tpu_custom_call.1} parent=39 // pred_check_branch
          %427 = sbr.rel (%p425) target = $region56
        $region55: #{tpu_custom_call.1} parent=39 // pred_region
          %p428 = scmp.lt.s32.totalorder %s33, 1
          %s429 = scalar_select %p428, %s33, 1
          %p430 = scmp.lt.s32.totalorder %s35, 0
          %s431 = scalar_select %p430, %s35, 0
          %s432 = sadd.s32 %s431, %s429
          %s433 = scalar_lea.vmem %s3, %s432
        $region56: #{tpu_custom_call.1} parent=39 // pred_fallthru
          _
      $region40: #{tpu_custom_call.1} parent=5 // pred_fallthru
        _
      %p434 = scmp.le.s32.totalorder 1, %s26
      %p435 = scmp.lt.s32.totalorder %s26, 3
      %p436 = pnand %p434, %p435
      %p437 = pneg %p436
      // Predicated region
      $region57: #{tpu_custom_call.1} parent=5 // pred_check
        _
      $region58: #{tpu_custom_call.1} parent=5 // pred_check_branch
        %439 = sbr.rel (%p436) target = $region60
      $region59: #{tpu_custom_call.1} parent=5 // pred_region
        %s440 = ssub.s32 %s26, 1
        %s441 = sand.u32 %s60, 1
        %s442 = scalar_lea.sflag [#allocation7], %s441
        %s443 = sand.u32 %s60, 1
        %s444 = smul.addr %s443, 4
        %s445 = scalar_lea.vmem [#allocation6], %s444
        // Predicated region
        $region61: #{tpu_custom_call.1} parent=59 // pred_check
          %p446 = pneg %p73
        $region62: #{tpu_custom_call.1} parent=59 // pred_check_branch
          %448 = sbr.rel (%p446) target = $region64
        $region63: #{tpu_custom_call.1} parent=59 // pred_region
          %449 = dma.done %s442, 64
        $region64: #{tpu_custom_call.1} parent=59 // pred_fallthru
          _
        %s450 = sand.u32 %s31, 1
        %s451 = scalar_lea.sflag [#allocation10], %s450
        %s452 = sand.u32 %s88, 1
        %s453 = smul.addr %s452, 4
        %s454 = scalar_lea.vmem [#allocation9], %s453
        // Predicated region
        $region65: #{tpu_custom_call.1} parent=59 // pred_check
          %p455 = pneg %p101
        $region66: #{tpu_custom_call.1} parent=59 // pred_check_branch
          %457 = sbr.rel (%p455) target = $region68
        $region67: #{tpu_custom_call.1} parent=59 // pred_region
          %458 = dma.done %s451, 64
        $region68: #{tpu_custom_call.1} parent=59 // pred_fallthru
          _
        %s459 = sand.u32 %s31, 1
        %s460 = scalar_lea.sflag [#allocation10], %s459
        %s461 = sand.u32 %s116, 1
        %s462 = smul.addr %s461, 4
        %s463 = scalar_lea.vmem [#allocation11], %s462
        // Predicated region
        $region69: #{tpu_custom_call.1} parent=59 // pred_check
          %p464 = pneg %p129
        $region70: #{tpu_custom_call.1} parent=59 // pred_check_branch
          %466 = sbr.rel (%p464) target = $region72
        $region71: #{tpu_custom_call.1} parent=59 // pred_region
          %467 = dma.done %s460, 64
        $region72: #{tpu_custom_call.1} parent=59 // pred_fallthru
          _
        // Predicated region
        $region73: #{tpu_custom_call.1} parent=59 // pred_check
          %p468 = pneg %p178
        $region74: #{tpu_custom_call.1} parent=59 // pred_check_branch
          %470 = sbr.rel (%p468) target = $region76
        $region75: #{tpu_custom_call.1} parent=59 // pred_region
          %471 = dma.done [#allocation13], 256
        $region76: #{tpu_custom_call.1} parent=59 // pred_fallthru
          _
        // Predicated region
        $region77: #{tpu_custom_call.1} parent=59 // pred_check
          %p472 = pneg %p262
        $region78: #{tpu_custom_call.1} parent=59 // pred_check_branch
          %474 = sbr.rel (%p472) target = $region80
        $region79: #{tpu_custom_call.1} parent=59 // pred_region
          %475 = dma.done [#allocation13], 256
        $region80: #{tpu_custom_call.1} parent=59 // pred_fallthru
          _
        %s476 = sand.u32 %s60, 1
        %s477 = scalar_lea.sflag [#allocation7], %s476
        %s478 = sand.u32 %s60, 1
        %s479 = smul.addr %s478, 4
        %s480 = scalar_lea.vmem [#allocation6], %s479
        %p481 = pneg %p73
        %p482 = pneg %p70
        %s483 = sand.u32 %s31, 1
        %s484 = scalar_lea.sflag [#allocation10], %s483
        %s485 = sand.u32 %s88, 1
        %s486 = smul.addr %s485, 4
        %s487 = scalar_lea.vmem [#allocation9], %s486
        %p488 = pneg %p101
        %p489 = pneg %p98
        %s490 = sand.u32 %s31, 1
        %s491 = scalar_lea.sflag [#allocation10], %s490
        %s492 = sand.u32 %s116, 1
        %s493 = smul.addr %s492, 4
        %s494 = scalar_lea.vmem [#allocation11], %s493
        %p495 = pneg %p129
        %p496 = pneg %p126
        %p497 = scmp.lt.s32.totalorder %s36, 1
        %s498 = scalar_select %p497, %s36, 1
        %p499 = scmp.lt.s32.totalorder %s38, 0
        %s500 = scalar_select %p499, %s38, 0
        %s501 = sadd.s32 %s500, %s498
        %s502 = scalar_lea.vmem %s3, %s501
        %p503 = pneg %p157
        %p504 = pneg %p154
        %p505 = pneg %p178
        %p506 = pneg %p175
        %p507 = pneg %p199
        %p508 = pneg %p196
        %p509 = pneg %p220
        %p510 = pneg %p217
        %p511 = pneg %p241
        %p512 = pneg %p238
        %p513 = pneg %p262
        %p514 = pneg %p259
        %p515 = pneg %p283
        %p516 = pneg %p280
        %p517 = pneg %p311
        %p518 = pneg %p308
        %s519 = sand.u32 %s298, 1
        %s520 = scalar_lea.sflag [#allocation8], %s519
        %s521 = sand.u32 %s298, 1
        %s522 = smul.addr %s521, 8
        %s523 = scalar_lea.vmem [#allocation15], %s522
        %p524 = scmp.lt.s32.totalorder %s36, 1
        %s525 = scalar_select %p524, %s36, 1
        %p526 = scmp.lt.s32.totalorder %s38, 0
        %s527 = scalar_select %p526, %s38, 0
        %s528 = sadd.s32 %s527, %s525
        %s529 = scalar_lea.vmem %s3, %s528
        %p531 = scmp.eq.s32.totalorder %s38, 0
        // Predicated region
        $region81: #{tpu_custom_call.1} parent=59 // pred_check
          %p532 = pneg %p531
        $region82: #{tpu_custom_call.1} parent=59 // pred_check_branch
          %534 = sbr.rel (%p532) target = $region84
        $region83: #{tpu_custom_call.1} parent=59 // pred_region
          %v535 = vld [vmem:[%s445] sm:$0xf]
          %v536 = vld [vmem:[#allocation12] sm:$0xf]
          %v537 = vld [vmem:[#allocation12 + $0x4] sm:$0xf]
          %v538 = vld [vmem:[#allocation12 + $0x8] sm:$0xf]
          %v539 = vld [vmem:[#allocation12 + $0xc] sm:$0xf]
          %v540 = vld [vmem:[%s5] sm:$0x1]
          %v542 = vlaneseq
          %v543 = vshrl.u32 %v542, 7
          %v544 = vsub.s32 0, %v543
          %v545 = vrot.slane %v540, %v544
          %v551 = vunpack.c.l.b16 %v536
          %v552 = vunpack.c.l.b16 %v537
          %v553 = vunpack.c.l.b16 %v538
          %v554 = vunpack.c.l.b16 %v539
          %v555 = vpack.c.b16 %v552, %v551
          %v556 = vpack.c.b16 %v554, %v553
          %vm559 = vcmask 261120
          %v561 = vsel %vm559, %v535, 0
          %563 = vmatprep.subr.bf16.mxu0 0
          %564 = vmatpush1.bf16.msra.mxu0 %v555
          %565 = vmatprep.subr.bf16.mxu0 0
          %566 = vmatpush1.bf16.msra.mxu0 %v556
          %567 = vmatprep.subr.bf16.mxu0 0
          %568 = vmatpush1.bf16.msra.mxu0 0
          %569 = vmatprep.subr.bf16.mxu0 0
          %570 = vmatpush1.bf16.msra.mxu0 0
          %571 = vmatprep.subr.bf16.mxu0 0
          %572 = vmatpush1.bf16.msra.mxu0 0
          %573 = vmatprep.subr.bf16.mxu0 0
          %574 = vmatpush1.bf16.msra.mxu0 0
          %575 = vmatprep.subr.bf16.mxu0 0
          %576 = vmatpush1.bf16.msra.mxu0 0
          %577 = vmatprep.subr.bf16.mxu0 0
          %578 = vmatpush1.bf16.msra.mxu0 0
          %579 = vmatprep.subr.bf16.mxu0 0
          %580 = vmatpush1.bf16.msra.mxu0 0
          %581 = vmatprep.subr.bf16.mxu0 0
          %582 = vmatpush1.bf16.msra.mxu0 0
          %583 = vmatprep.subr.bf16.mxu0 0
          %584 = vmatpush1.bf16.msra.mxu0 0
          %585 = vmatprep.subr.bf16.mxu0 0
          %586 = vmatpush1.bf16.msra.mxu0 0
          %587 = vmatprep.subr.bf16.mxu0 0
          %588 = vmatpush1.bf16.msra.mxu0 0
          %589 = vmatprep.subr.bf16.mxu0 0
          %590 = vmatpush1.bf16.msra.mxu0 0
          %591 = vmatprep.subr.bf16.mxu0 0
          %592 = vmatpush1.bf16.msra.mxu0 0
          %593 = vmatprep.subr.bf16.mxu0 0
          %594 = vmatpush1.bf16.msra.mxu0 0
          %595 = vmatprep.mubr.bf16.mxu0 0
          %596 = vmatmul.mubr.bf16.gmra.mrb[0].mxu0 %v561
          %v597 = vpop.f32.mrb[0].mxu0
          %v598 = vadd.f32 %v545, %v597
          %v599 = vpop.f32.mrb[0].mxu0
          %v600 = vpop.f32.mrb[0].mxu0
          %v601 = vpop.f32.mrb[0].mxu0
          %602 = vdwg.mxu0
          %v603 = vmul.f32 %v598, 0.25
          %v604 = vpack.c.bf16 %v603, %v603
          %605 = vst [vmem:[#allocation2] sm:$0xf] %v604
          %vm606 = vcmask 7168
          %607 = vst.msk [vmem:[#allocation3] sm:$0xff] %vm606, -inf
          %608 = vst.msk [vmem:[#allocation4] sm:$0xff] %vm606, 0.0
          %609 = vst [vmem:[#allocation5] sm:$0xff] 0.0
        $region84: #{tpu_custom_call.1} parent=59 // pred_fallthru
          _
        %v610 = vld [vmem:[%s454] sm:$0xf]
        %v611 = vld [vmem:[%s6] sm:$0xf]
        %v612 = vld [vmem:[%s6 + $0x4] sm:$0xf]
        %v613 = vld [vmem:[%s6 + $0x8] sm:$0xf]
        %v614 = vld [vmem:[%s6 + $0xc] sm:$0xf]
        %v615 = vld [vmem:[%s7] sm:$0x1]
        %v617 = vlaneseq
        %v618 = vshrl.u32 %v617, 7
        %v619 = vsub.s32 0, %v618
        %v620 = vrot.slane %v615, %v619
        %v626 = vunpack.c.l.b16 %v611
        %v627 = vunpack.c.l.b16 %v612
        %v628 = vunpack.c.l.b16 %v613
        %v629 = vunpack.c.l.b16 %v614
        %v630 = vpack.c.b16 %v627, %v626
        %v631 = vpack.c.b16 %v629, %v628
        %vm634 = vcmask 261120
        %v636 = vsel %vm634, %v610, 0
        %638 = vmatprep.subr.bf16.mxu0 0
        %639 = vmatpush1.bf16.msra.mxu0 %v630
        %640 = vmatprep.subr.bf16.mxu0 0
        %641 = vmatpush1.bf16.msra.mxu0 %v631
        %642 = vmatprep.subr.bf16.mxu0 0
        %643 = vmatpush1.bf16.msra.mxu0 0
        %644 = vmatprep.subr.bf16.mxu0 0
        %645 = vmatpush1.bf16.msra.mxu0 0
        %646 = vmatprep.subr.bf16.mxu0 0
        %647 = vmatpush1.bf16.msra.mxu0 0
        %648 = vmatprep.subr.bf16.mxu0 0
        %649 = vmatpush1.bf16.msra.mxu0 0
        %650 = vmatprep.subr.bf16.mxu0 0
        %651 = vmatpush1.bf16.msra.mxu0 0
        %652 = vmatprep.subr.bf16.mxu0 0
        %653 = vmatpush1.bf16.msra.mxu0 0
        %654 = vmatprep.subr.bf16.mxu0 0
        %655 = vmatpush1.bf16.msra.mxu0 0
        %656 = vmatprep.subr.bf16.mxu0 0
        %657 = vmatpush1.bf16.msra.mxu0 0
        %658 = vmatprep.subr.bf16.mxu0 0
        %659 = vmatpush1.bf16.msra.mxu0 0
        %660 = vmatprep.subr.bf16.mxu0 0
        %661 = vmatpush1.bf16.msra.mxu0 0
        %662 = vmatprep.subr.bf16.mxu0 0
        %663 = vmatpush1.bf16.msra.mxu0 0
        %664 = vmatprep.subr.bf16.mxu0 0
        %665 = vmatpush1.bf16.msra.mxu0 0
        %666 = vmatprep.subr.bf16.mxu0 0
        %667 = vmatpush1.bf16.msra.mxu0 0
        %668 = vmatprep.subr.bf16.mxu0 0
        %669 = vmatpush1.bf16.msra.mxu0 0
        %670 = vmatprep.mubr.bf16.mxu0 0
        %671 = vmatmul.mubr.bf16.gmra.mrb[0].mxu0 %v636
        %v672 = vpop.f32.mrb[0].mxu0
        %v673 = vadd.f32 %v620, %v672
        %v674 = vpop.f32.mrb[0].mxu0
        %v675 = vpop.f32.mrb[0].mxu0
        %v676 = vpop.f32.mrb[0].mxu0
        %677 = vdwg.mxu0
        %v678 = vld [vmem:[%s463] sm:$0xf]
        %v679 = vld [vmem:[#allocation14] sm:$0xf]
        %v680 = vld [vmem:[#allocation14 + $0x4] sm:$0xf]
        %v681 = vld [vmem:[#allocation14 + $0x8] sm:$0xf]
        %v682 = vld [vmem:[#allocation14 + $0xc] sm:$0xf]
        %v683 = vld [vmem:[%s9] sm:$0x1]
        %v685 = vlaneseq
        %v686 = vshrl.u32 %v685, 7
        %v687 = vsub.s32 0, %v686
        %v688 = vrot.slane %v683, %v687
        %v694 = vunpack.c.l.b16 %v679
        %v695 = vunpack.c.l.b16 %v680
        %v696 = vunpack.c.l.b16 %v681
        %v697 = vunpack.c.l.b16 %v682
        %v698 = vpack.c.b16 %v695, %v694
        %v699 = vpack.c.b16 %v697, %v696
        %v703 = vsel %vm634, %v678, 0
        %705 = vmatprep.subr.bf16.mxu0 0
        %706 = vmatpush1.bf16.msra.mxu0 %v698
        %707 = vmatprep.subr.bf16.mxu0 0
        %708 = vmatpush1.bf16.msra.mxu0 %v699
        %709 = vmatprep.subr.bf16.mxu0 0
        %710 = vmatpush1.bf16.msra.mxu0 0
        %711 = vmatprep.subr.bf16.mxu0 0
        %712 = vmatpush1.bf16.msra.mxu0 0
        %713 = vmatprep.subr.bf16.mxu0 0
        %714 = vmatpush1.bf16.msra.mxu0 0
        %715 = vmatprep.subr.bf16.mxu0 0
        %716 = vmatpush1.bf16.msra.mxu0 0
        %717 = vmatprep.subr.bf16.mxu0 0
        %718 = vmatpush1.bf16.msra.mxu0 0
        %719 = vmatprep.subr.bf16.mxu0 0
        %720 = vmatpush1.bf16.msra.mxu0 0
        %721 = vmatprep.subr.bf16.mxu0 0
        %722 = vmatpush1.bf16.msra.mxu0 0
        %723 = vmatprep.subr.bf16.mxu0 0
        %724 = vmatpush1.bf16.msra.mxu0 0
        %725 = vmatprep.subr.bf16.mxu0 0
        %726 = vmatpush1.bf16.msra.mxu0 0
        %727 = vmatprep.subr.bf16.mxu0 0
        %728 = vmatpush1.bf16.msra.mxu0 0
        %729 = vmatprep.subr.bf16.mxu0 0
        %730 = vmatpush1.bf16.msra.mxu0 0
        %731 = vmatprep.subr.bf16.mxu0 0
        %732 = vmatpush1.bf16.msra.mxu0 0
        %733 = vmatprep.subr.bf16.mxu0 0
        %734 = vmatpush1.bf16.msra.mxu0 0
        %735 = vmatprep.subr.bf16.mxu0 0
        %736 = vmatpush1.bf16.msra.mxu0 0
        %737 = vmatprep.mubr.bf16.mxu0 0
        %738 = vmatmul.mubr.bf16.gmra.mrb[0].mxu0 %v703
        %v739 = vpop.f32.mrb[0].mxu0
        %v740 = vadd.f32 %v688, %v739
        %v741 = vpop.f32.mrb[0].mxu0
        %v742 = vpop.f32.mrb[0].mxu0
        %v743 = vpop.f32.mrb[0].mxu0
        %744 = vdwg.mxu0
        %v745 = vld [vmem:[#allocation2] sm:$0xf]
        %v746 = vpack.c.bf16 %v673, %v673
        %747 = vmatprep.subr.bf16.mxu0 0
        %748 = vmatpush1.bf16.xpose.msra.mxu0 %v746
        %749 = vmatprep.subr.bf16.mxu0 0
        %750 = vmatpush1.bf16.xpose.msra.mxu0 0
        %751 = vmatprep.subr.bf16.mxu0 0
        %752 = vmatpush1.bf16.xpose.msra.mxu0 0
        %753 = vmatprep.subr.bf16.mxu0 0
        %754 = vmatpush1.bf16.xpose.msra.mxu0 0
        %755 = vmatprep.subr.bf16.mxu0 0
        %756 = vmatpush1.bf16.xpose.msra.mxu0 0
        %757 = vmatprep.subr.bf16.mxu0 0
        %758 = vmatpush1.bf16.xpose.msra.mxu0 0
        %759 = vmatprep.subr.bf16.mxu0 0
        %760 = vmatpush1.bf16.xpose.msra.mxu0 0
        %761 = vmatprep.subr.bf16.mxu0 0
        %762 = vmatpush1.bf16.xpose.msra.mxu0 0
        %763 = vmatprep.subr.bf16.mxu0 0
        %764 = vmatpush1.bf16.xpose.msra.mxu0 0
        %765 = vmatprep.subr.bf16.mxu0 0
        %766 = vmatpush1.bf16.xpose.msra.mxu0 0
        %767 = vmatprep.subr.bf16.mxu0 0
        %768 = vmatpush1.bf16.xpose.msra.mxu0 0
        %769 = vmatprep.subr.bf16.mxu0 0
        %770 = vmatpush1.bf16.xpose.msra.mxu0 0
        %771 = vmatprep.subr.bf16.mxu0 0
        %772 = vmatpush1.bf16.xpose.msra.mxu0 0
        %773 = vmatprep.subr.bf16.mxu0 0
        %774 = vmatpush1.bf16.xpose.msra.mxu0 0
        %775 = vmatprep.subr.bf16.mxu0 0
        %776 = vmatpush1.bf16.xpose.msra.mxu0 0
        %777 = vmatprep.subr.bf16.mxu0 0
        %778 = vmatpush1.bf16.xpose.msra.mxu0 0
        %779 = vmatprep.mubr.bf16.mxu0 0
        %780 = vmatmul.mubr.bf16.gmra.mrb[0].mxu0 %v745
        %v781 = vpop.f32.mrb[0].mxu0
        %v782 = vadd.f32 0.0, %v781
        %v783 = vpop.f32.mrb[0].mxu0
        %v784 = vpop.f32.mrb[0].mxu0
        %v785 = vpop.f32.mrb[0].mxu0
        %786 = vdwg.mxu0
        %v787 = vld [vmem:[%s529] sm:$0x1]
        %vm788 = vcmp.eq.s32.totalorder %v787, 0
        %v789 = vsel %vm788, 1, 0
        %v790 = vlaneseq
        %v791 = vshrl.u32 %v790, 7
        %v792 = vsub.s32 0, %v791
        %v793 = vrot.slane %v789, %v792
        %vm794 = vcmp.eq.s32.totalorder %v793, 1
        %v795 = vsel %vm794, -1e+10, %v782
        %v796 = vld [vmem:[#allocation3] sm:$0xff]
        %vm797 = vcmask 64512
        %v798 = vsel %vm797, %v795, -inf
        %799 = vmax.xlane.f32.xlu0 %v798
        %v800 = vpop.xlane.xlu0 %799
        %v801 = vmax.f32 %v796, %v800
        %v802 = vsub.f32 %v796, %v801
        %v803 = vmul.f32 %v802, 1.442695
        %v804 = vpow.pop %v803
        %806 = vset.pattern.permute.xlu0 0
        %807 = vperm.xlu0 %806, %v801
        %v808 = vpop.permute.xlu0 %807
        %v810 = vsub.f32 %v795, %v808
        %v811 = vmul.f32 %v810, 1.442695
        %v812 = vpow.pop %v811
        %v813 = vld [vmem:[#allocation4] sm:$0xff]
        %v814 = vmul.f32 %v804, %v813
        %v815 = vsel %vm797, %v812, 0.0
        %816 = vadd.xlane.f32.xlu0 %v815
        %v817 = vpop.xlane.xlu0 %816
        %v818 = vadd.f32 %v814, %v817
        %vm819 = vcmask 7168
        %820 = vst.msk [vmem:[#allocation4] sm:$0xff] %vm819, %v818
        %v821 = vld [vmem:[#allocation5] sm:$0xff]
        %823 = vset.pattern.permute.xlu0 0
        %824 = vperm.xlu0 %823, %v804
        %v825 = vpop.permute.xlu0 %824
        %v827 = vmul.f32 %v825, %v821
        %v828 = vpack.c.bf16 %v812, %v812
        %v829 = vpack.c.bf16 %v740, %v740
        %v831 = vsel %vm797, %v828, 0
        %vm833 = vcmask 1043456
        %v835 = vsel %vm833, %v829, 0
        %837 = vmatprep.subr.bf16.mxu0 0
        %838 = vmatpush1.bf16.msra.mxu0 %v835
        %839 = vmatprep.subr.bf16.mxu0 0
        %840 = vmatpush1.bf16.msra.mxu0 0
        %841 = vmatprep.subr.bf16.mxu0 0
        %842 = vmatpush1.bf16.msra.mxu0 0
        %843 = vmatprep.subr.bf16.mxu0 0
        %844 = vmatpush1.bf16.msra.mxu0 0
        %845 = vmatprep.subr.bf16.mxu0 0
        %846 = vmatpush1.bf16.msra.mxu0 0
        %847 = vmatprep.subr.bf16.mxu0 0
        %848 = vmatpush1.bf16.msra.mxu0 0
        %849 = vmatprep.subr.bf16.mxu0 0
        %850 = vmatpush1.bf16.msra.mxu0 0
        %851 = vmatprep.subr.bf16.mxu0 0
        %852 = vmatpush1.bf16.msra.mxu0 0
        %853 = vmatprep.subr.bf16.mxu0 0
        %854 = vmatpush1.bf16.msra.mxu0 0
        %855 = vmatprep.subr.bf16.mxu0 0
        %856 = vmatpush1.bf16.msra.mxu0 0
        %857 = vmatprep.subr.bf16.mxu0 0
        %858 = vmatpush1.bf16.msra.mxu0 0
        %859 = vmatprep.subr.bf16.mxu0 0
        %860 = vmatpush1.bf16.msra.mxu0 0
        %861 = vmatprep.subr.bf16.mxu0 0
        %862 = vmatpush1.bf16.msra.mxu0 0
        %863 = vmatprep.subr.bf16.mxu0 0
        %864 = vmatpush1.bf16.msra.mxu0 0
        %865 = vmatprep.subr.bf16.mxu0 0
        %866 = vmatpush1.bf16.msra.mxu0 0
        %867 = vmatprep.subr.bf16.mxu0 0
        %868 = vmatpush1.bf16.msra.mxu0 0
        %869 = vmatprep.mubr.bf16.mxu0 0
        %870 = vmatmul.mubr.bf16.gmra.mrb[0].mxu0 %v831
        %v871 = vpop.f32.mrb[0].mxu0
        %v872 = vadd.f32 0.0, %v871
        %v873 = vpop.f32.mrb[0].mxu0
        %v874 = vpop.f32.mrb[0].mxu0
        %v875 = vpop.f32.mrb[0].mxu0
        %876 = vdwg.mxu0
        %v877 = vadd.f32 %v827, %v872
        %878 = vst [vmem:[#allocation5] sm:$0xff] %v877
        %879 = vst.msk [vmem:[#allocation3] sm:$0xff] %vm819, %v801
        // Predicated region
        $region85: #{tpu_custom_call.1} parent=59 // pred_check
          %p880 = pneg %p531
        $region86: #{tpu_custom_call.1} parent=59 // pred_check_branch
          %882 = sbr.rel (%p880) target = $region88
        $region87: #{tpu_custom_call.1} parent=59 // pred_region
          %v883 = vld [vmem:[#allocation4] sm:$0xff]
          %v884 = vrcp.pop %v883
          %v885 = vld [vmem:[#allocation5] sm:$0xff]
          %887 = vset.pattern.permute.xlu0 0
          %888 = vperm.xlu0 %887, %v884
          %v889 = vpop.permute.xlu0 %888
          %v891 = vmul.f32 %v885, %v889
          %892 = vst [vmem:[%s523] sm:$0xff] %v891
        $region88: #{tpu_custom_call.1} parent=59 // pred_fallthru
          _
        %s893 = sand.u32 %s298, 1
        %s894 = scalar_lea.sflag [#allocation8], %s893
        %s895 = sand.u32 %s298, 1
        %s896 = smul.addr %s895, 8
        %s897 = scalar_lea.vmem [#allocation15], %s896
        // Predicated region
        $region89: #{tpu_custom_call.1} parent=59 // pred_check
          %p898 = pneg %p308
        $region90: #{tpu_custom_call.1} parent=59 // pred_check_branch
          %900 = sbr.rel (%p898) target = $region92
        $region91: #{tpu_custom_call.1} parent=59 // pred_region
          %s902 = ssub.s32 128, 128
          %903 = vsyncadd %s894, %s902
          %s904 = sadd.s32 %s37, %s36
          %s905 = smul.addr %s904, 128
          %s906 = scalar_lea.hbm %s10, %s905
          %s908 = sshll.u32 %s897, 4
          %s909 = int_to_ptr.vmem [resolvable:$true] %s908
          %911 = dma.vmem_to_hbm [thread:$0]  %s909, 128, %s906, %s894
        $region92: #{tpu_custom_call.1} parent=59 // pred_fallthru
          _
      $region60: #{tpu_custom_call.1} parent=5 // pred_fallthru
        _
      %p912 = scmp.le.s32.totalorder 2, %s26
      // Predicated region
      $region93: #{tpu_custom_call.1} parent=5 // pred_check
        %p913 = pneg %p912
      $region94: #{tpu_custom_call.1} parent=5 // pred_check_branch
        %915 = sbr.rel (%p913) target = $region96
      $region95: #{tpu_custom_call.1} parent=5 // pred_region
        %s916 = ssub.s32 %s26, 2
        // Predicated region
        $region97: #{tpu_custom_call.1} parent=95 // pred_check
          %p917 = pneg %p314
        $region98: #{tpu_custom_call.1} parent=95 // pred_check_branch
          %919 = sbr.rel (%p917) target = $region100
        $region99: #{tpu_custom_call.1} parent=95 // pred_region
          %s920 = sand.u32 %s299, 1
          %s921 = scalar_lea.sflag [#allocation8], %s920
          %s922 = sand.u32 %s299, 1
          %s923 = smul.addr %s922, 8
          %s924 = scalar_lea.vmem [#allocation15], %s923
          %925 = dma.done %s921, 128
        $region100: #{tpu_custom_call.1} parent=95 // pred_fallthru
          _
      $region96: #{tpu_custom_call.1} parent=5 // pred_fallthru
        _
    $region6: #{tpu_custom_call.1} parent=1 // loop_footer
      %s30 = sadd.s32 1, %s26
    $region7: #{tpu_custom_call.1} parent=1 // loop_footer_branch
      %25 = sbr.rel target = $region3
    $region8: #{tpu_custom_call.1} parent=1 // loop_exit
      _
    %926 = vsyncpa [#allocation7], 1
    %s927 = scalar_lea.sflag [#allocation7], 1
    %928 = vsyncpa %s927, 1
    %929 = vsyncpa [#allocation10], 1
    %s930 = scalar_lea.sflag [#allocation10], 1
    %931 = vsyncpa %s930, 1
    %932 = vsyncpa [#allocation13], 1
    %933 = vsyncpa [#allocation8], 1
    %s934 = scalar_lea.sflag [#allocation8], 1
    %935 = vsyncpa %s934, 1

</llo_original>
